<compile_context>
chip_gen: v6e
topology: v6e:2x2x1
jax: 0.10.0
libtpu: 0.0.40
codegen_flags: <defaults>
</compile_context>

<pallas_src>
import jax
import jax.numpy as jnp
from jax.experimental import pallas as pl
from jax.experimental.pallas import tpu as pltpu

IN_FEATURES = 100
OUT_FEATURES = 32

ROW_PACK = 4                              # 4 rows * 32 feats = 128 output lanes
PACKED_IN = ROW_PACK * IN_FEATURES        # 400
PACKED_OUT = ROW_PACK * OUT_FEATURES      # 128
LANES_IN = 512                            # 400 padded to the 128-lane quantum

# VMEM budget derived for the smallest generation (v7x: 64 MiB physical per TC).
# 48 MiB leaves double-buffering/compiler headroom and is well inside the
# 128 MiB of v5e/v6e.
VMEM_BUDGET_BYTES = 48 * 1024 * 1024


def _round_up(v, m):
    return -(-v // m) * m


def dense_kernel(x_ref, w_ref, b_ref, o_ref):
    # x_ref: (tbp, 400)  w_ref: (400, 128)  b_ref: (1, 128)  o_ref: (tbp, 128)
    acc = jnp.dot(x_ref[...], w_ref[...], preferred_element_type=jnp.float32)
    o_ref[...] = (acc + b_ref[...]).astype(o_ref.dtype)


def pack_params(weight, bias):
    """PyTorch-layout params -> lane-dense packed params.  Call ONCE at init.

    weight: (32, 100), bias: (32,)
      -> w_packed: (400, 128) block-diagonal with W^T (100, 32) blocks
      -> b_packed: (1, 128)  = bias tiled ROW_PACK times
    """
    wt = weight.astype(jnp.float32).T                               # (100, 32)
    w_packed = jnp.kron(jnp.eye(ROW_PACK, dtype=jnp.float32), wt)   # (400, 128)
    b_packed = jnp.tile(bias.astype(jnp.float32), ROW_PACK).reshape(1, PACKED_OUT)
    return w_packed, b_packed


def _dense_bulk(xp, w, b, *, block_rows, vmem_budget=VMEM_BUDGET_BYTES):
    """xp: (R, 400) -> (R, 128) f32 via the lane-dense Pallas matmul."""
    R = xp.shape[0]
    x_bytes = jnp.dtype(xp.dtype).itemsize
    w_bytes = jnp.dtype(w.dtype).itemsize

    # --- cap the batch tile against the per-generation VMEM budget ---------
    per_row = 2 * (LANES_IN * x_bytes + PACKED_OUT * 4)       # dbl-buffered x + f32 out
    fixed = 2 * (LANES_IN * PACKED_OUT * w_bytes + PACKED_OUT * 4) + (1 << 20)
    max_tbp = max(8, ((vmem_budget - fixed) // per_row) // 8 * 8)
    block_rows = min(block_rows, max_tbp)

    # --- tile selection: keep >= 2 grid steps so v7x's 2 TCs both get work --
    if R <= 8:
        tbp = R                                   # tiny batch: single full block
    elif R <= 2 * block_rows:
        tbp = min(_round_up(pl.cdiv(R, 2), 8), block_rows)
    else:
        tbp = block_rows
    grid = (pl.cdiv(R, tbp),)

    cost = pl.CostEstimate(
        flops=2 * R * PACKED_IN * PACKED_OUT,
        transcendentals=0,
        bytes_accessed=(R * PACKED_IN * x_bytes + R * PACKED_OUT * 4
                        + w.size * w_bytes + PACKED_OUT * 4),
    )

    return pl.pallas_call(
        dense_kernel,
        out_shape=jax.ShapeDtypeStruct((R, PACKED_OUT), jnp.float32),
        grid=grid,
        in_specs=[
            pl.BlockSpec((tbp, PACKED_IN), lambda i: (i, 0)),          # streamed
            pl.BlockSpec((PACKED_IN, PACKED_OUT), lambda i: (0, 0)),   # resident
            pl.BlockSpec((1, PACKED_OUT), lambda i: (0, 0)),           # resident
        ],
        out_specs=pl.BlockSpec((tbp, PACKED_OUT), lambda i: (i, 0)),
        compiler_params=pltpu.CompilerParams(
            dimension_semantics=("parallel",),
            vmem_limit_bytes=vmem_budget),
        cost_estimate=cost,
    )(xp, w, b)


def small_speech_prediction(x, w_packed, b_packed, *, block_rows=8192,
                            stream_bf16=False):
    """x: (B, 100); w_packed/b_packed from pack_params. Returns (B, 32) f32.

    stream_bf16=True halves x HBM traffic (kernel still accumulates in f32)
    but no longer bit-matches the exact f32 nn.Linear forward.
    """
    assert x.ndim == 2 and x.shape[1] == IN_FEATURES
    assert block_rows % 8 == 0
    B = x.shape[0]
    B_full = (B // ROW_PACK) * ROW_PACK

    outs = []
    if B_full:
        xp = x[:B_full].reshape(B_full // ROW_PACK, PACKED_IN)
        if stream_bf16:
            xp = xp.astype(jnp.bfloat16)
            w = w_packed.astype(jnp.bfloat16)   # tiny (400x128) cast per call
        else:
            xp = xp.astype(jnp.float32)
            w = w_packed
        outp = _dense_bulk(xp, w, b_packed, block_rows=block_rows)
        outs.append(outp.reshape(B_full, OUT_FEATURES))

    if B != B_full:
        # Ragged tail (< ROW_PACK rows): tiny plain-XLA matmul in f32.
        # Avoids the old jnp.pad, which re-materialized the whole x in HBM.
        wt = w_packed[:IN_FEATURES, :OUT_FEATURES]        # exactly W^T (f32)
        bt = b_packed[0, :OUT_FEATURES]
        xt = x[B_full:].astype(jnp.float32)
        outs.append(jnp.dot(xt, wt, preferred_element_type=jnp.float32) + bt)

    return outs[0] if len(outs) == 1 else jnp.concatenate(outs, axis=0)


def init_params(key):
    # Deterministic init mimicking nn.Linear default (uniform +/- 1/sqrt(fan_in)).
    kw, kb = jax.random.split(key)
    bound = 1.0 / (IN_FEATURES ** 0.5)
    weight = jax.random.uniform(
        kw, (OUT_FEATURES, IN_FEATURES), jnp.float32, -bound, bound)
    bias = jax.random.uniform(
        kb, (OUT_FEATURES,), jnp.float32, -bound, bound)
    return weight, bias


if __name__ == "__main__":
    key = jax.random.PRNGKey(0)
    kx, kp = jax.random.split(key)

    weight, bias = init_params(kp)
    # One-time parameter packing (outside the hot path).
    w_packed, b_packed = pack_params(weight, bias)

    # NOTE: at these demo sizes the call is a single, latency-dominated grid
    # step; the tile-size / VMEM / megacore levers only pay off at large B.
    B = 8
    x = jax.random.normal(kx, (B, IN_FEATURES), jnp.float32)
    out = jax.block_until_ready(small_speech_prediction(x, w_packed, b_packed))
    ref = x @ weight.T + bias
    assert out.shape == (B, OUT_FEATURES)
    assert jnp.allclose(out, ref, atol=1e-4, rtol=1e-4)

    # Ragged batch: bulk through the kernel, <4-row tail via a tiny XLA dot.
    B2 = 10
    x2 = jax.random.normal(kx, (B2, IN_FEATURES), jnp.float32)
    out2 = jax.block_until_ready(small_speech_prediction(x2, w_packed, b_packed))
    ref2 = x2 @ weight.T + bias
    assert out2.shape == (B2, OUT_FEATURES)
    assert jnp.allclose(out2, ref2, atol=1e-4, rtol=1e-4)

    # Opt-in bf16 streaming path (looser tolerance vs. exact f32 reference).
    out3 = jax.block_until_ready(
        small_speech_prediction(x, w_packed, b_packed, stream_bf16=True))
    assert out3.shape == (B, OUT_FEATURES)
    assert jnp.allclose(out3, ref, atol=5e-2, rtol=5e-2)

    print("KERNEL_OK")
</pallas_src>

<mosaic_0001>
module attributes {stable_mosaic.version = 11 : i64} {
  func.func @dense_kernel(%arg0: i32, %arg1: memref<2x400xf32, #tpu.memory_space<vmem>>, %arg2: memref<400x128xf32, #tpu.memory_space<vmem>>, %arg3: memref<1x128xf32, #tpu.memory_space<vmem>>, %arg4: memref<2x128xf32, #tpu.memory_space<vmem>>) attributes {dimension_semantics = [#tpu.dimension_semantics<parallel>], iteration_bounds = array<i64: 1>, scalar_prefetch = 0 : i64, scratch_operands = 0 : i64, tpu.core_type = #tpu.core_type<tc>, window_params = [{transform_indices = @transform_0, window_bounds = array<i64: 2, 400>}, {pipeline_mode = #tpu.pipeline_mode<synchronous>, transform_indices = @transform_1, window_bounds = array<i64: 400, 128>}, {pipeline_mode = #tpu.pipeline_mode<synchronous>, transform_indices = @transform_2, window_bounds = array<i64: 1, 128>}, {transform_indices = @transform_3, window_bounds = array<i64: 2, 128>}]} {
    %c0 = arith.constant 0 : index
    %c0_0 = arith.constant 0 : index
    %0 = vector.load %arg1[%c0, %c0_0] : memref<2x400xf32, #tpu.memory_space<vmem>>, vector<2x400xf32>
    %c0_1 = arith.constant 0 : index
    %c0_2 = arith.constant 0 : index
    %1 = vector.load %arg2[%c0_1, %c0_2] : memref<400x128xf32, #tpu.memory_space<vmem>>, vector<400x128xf32>
    %cst = arith.constant dense<0.000000e+00> : vector<2x128xf32>
    %2 = tpu.matmul %0, %1, %cst {dimension_numbers = #tpu.dot_dimension_numbers<[1], [0], [0], [1], [0, 0, 1, 1], [], []>} : vector<2x400xf32>, vector<400x128xf32>, vector<2x128xf32> -> vector<2x128xf32>
    %c0_3 = arith.constant 0 : index
    %c0_4 = arith.constant 0 : index
    %3 = vector.load %arg3[%c0_3, %c0_4] : memref<1x128xf32, #tpu.memory_space<vmem>>, vector<1x128xf32>
    %4 = vector.broadcast %3 : vector<1x128xf32> to vector<2x128xf32>
    %5 = arith.addf %2, %4 : vector<2x128xf32>
    %c0_5 = arith.constant 0 : index
    %c0_6 = arith.constant 0 : index
    %6 = vector.load %arg4[%c0_5, %c0_6] : memref<2x128xf32, #tpu.memory_space<vmem>>, vector<2x128xf32>
    tpu.vector_store %arg4[%c0_5, %c0_6], %5 {strides = array<i32>} : memref<2x128xf32, #tpu.memory_space<vmem>>, vector<2x128xf32>,
    return
  }
  func.func @transform_0(%arg0: i32) -> (i32, i32) {
    %c0_i32 = arith.constant 0 : i32
    %c0_i32_0 = arith.constant 0 : i32
    return %arg0, %c0_i32 : i32, i32
  }
  func.func @transform_1(%arg0: i32) -> (i32, i32) {
    %c0_i32 = arith.constant 0 : i32
    %c0_i32_0 = arith.constant 0 : i32
    %c0_i32_1 = arith.constant 0 : i32
    return %c0_i32, %c0_i32_0 : i32, i32
  }
  func.func @transform_2(%arg0: i32) -> (i32, i32) {
    %c0_i32 = arith.constant 0 : i32
    %c0_i32_0 = arith.constant 0 : i32
    %c0_i32_1 = arith.constant 0 : i32
    return %c0_i32, %c0_i32_0 : i32, i32
  }
  func.func @transform_3(%arg0: i32) -> (i32, i32) {
    %c0_i32 = arith.constant 0 : i32
    %c0_i32_0 = arith.constant 0 : i32
    return %arg0, %c0_i32 : i32, i32
  }
}

</mosaic_0001>

<llo_original>
// kernel: tpu_custom_call.1
$region0: #{tpu_custom_call.1}
  #allocation0 [shape = 'u32[]', space=smem, size = 0x4, offset = 0x4, fixed_abs, tag = 'smem constant byte address 0x4 - core index']
  #allocation1 [shape = 'u32[144,128]{1,0:T(1,128)}', space=vmem, size = 0x12000, scoped, tag = 'internal scratch']
  %s0 = inlined_call_operand.hbm [shape: f32[2,400], index: 0, kind: input, shape index: {}]
  %s1 = inlined_call_operand.hbm [shape: f32[400,128], index: 1, kind: input, shape index: {}]
  %s2 = inlined_call_operand.vmem [shape: f32[1,128], index: 2, kind: input, shape index: {}]
  %s3 = inlined_call_operand.hbm [shape: f32[2,128], index: 3, kind: output, shape index: {}]
  %s4 = sld [smem:[#allocation0]]
  $region30: #{tpu_custom_call.1} parent=0
    _
  %s6 = ssub.s32 1, %s4
  %s7 = scalar_select 0, %s6, %s4
  $region1: #{tpu_custom_call.1} parent=0
    #allocation2 [shape = 'u8[4096]{0}', space=vmem, size = 0x1000, scoped, tag = 'input window, operand 0, single buffered']
    #allocation3 [shape = 's32[1]{0}', space=sflag, size = 0x4, scoped, tag = 'scoped memory for tpu_custom_call.1']
    #allocation4 [shape = 's32[1]{0}', space=sflag, size = 0x4, scoped, tag = 'scoped memory for tpu_custom_call.1']
    #allocation5 [shape = 'u8[204800]{0}', space=vmem, size = 0x32000, scoped, tag = 'input window, operand 1, single buffered']
    #allocation6 [shape = 's32[1]{0}', space=sflag, size = 0x4, scoped, tag = 'scoped memory for tpu_custom_call.1']
    #allocation7 [shape = 'u8[1024]{0}', space=vmem, size = 0x400, scoped, tag = 'output window, operand 0, single buffered']
    %8 = vsyncpa [#allocation3], 0
    %9 = vsyncpa [#allocation6], 0
    %10 = vsyncpa [#allocation4], 0
    // Predicated region
    $region2: #{tpu_custom_call.1} parent=1 // pred_check
      _
    $region3: #{tpu_custom_call.1} parent=1 // pred_check_branch
      %12 = sbr.rel (0) target = $region5
    $region4: #{tpu_custom_call.1} parent=1 // pred_region
      %s14 = ssub.s32 128, 128
      %15 = vsyncadd [#allocation3], %s14
      %s17 = sshll.u32 [#allocation2], 4
      %s18 = int_to_ptr.vmem [resolvable:$true] %s17
      %20 = dma.hbm_to_vmem [thread:$0]  %s0, 128, %s18, [#allocation3]
    $region5: #{tpu_custom_call.1} parent=1 // pred_fallthru
      _
    // Predicated region
    $region6: #{tpu_custom_call.1} parent=1 // pred_check
      _
    $region7: #{tpu_custom_call.1} parent=1 // pred_check_branch
      %22 = sbr.rel (0) target = $region9
    $region8: #{tpu_custom_call.1} parent=1 // pred_region
      %s24 = ssub.s32 6400, 6400
      %25 = vsyncadd [#allocation6], %s24
      %s26 = sshll.u32 [#allocation5], 4
      %s27 = int_to_ptr.vmem [resolvable:$true] %s26
      %32 = dma.hbm_to_vmem [thread:$0]  %s1, 6400, %s27, [#allocation6], 128, 128, 8
    $region9: #{tpu_custom_call.1} parent=1 // pred_fallthru
      _
    // Predicated region
    $region10: #{tpu_custom_call.1} parent=1 // pred_check
      _
    $region11: #{tpu_custom_call.1} parent=1 // pred_check_branch
      %34 = sbr.rel (0) target = $region13
    $region12: #{tpu_custom_call.1} parent=1 // pred_region
      _
    $region13: #{tpu_custom_call.1} parent=1 // pred_fallthru
      _
    // Predicated region
    $region14: #{tpu_custom_call.1} parent=1 // pred_check
      _
    $region15: #{tpu_custom_call.1} parent=1 // pred_check_branch
      %36 = sbr.rel (0) target = $region17
    $region16: #{tpu_custom_call.1} parent=1 // pred_region
      %37 = dma.done [#allocation3], 128
    $region17: #{tpu_custom_call.1} parent=1 // pred_fallthru
      _
    // Predicated region
    $region18: #{tpu_custom_call.1} parent=1 // pred_check
      _
    $region19: #{tpu_custom_call.1} parent=1 // pred_check_branch
      %39 = sbr.rel (0) target = $region21
    $region20: #{tpu_custom_call.1} parent=1 // pred_region
      %40 = dma.done [#allocation6], 6400
    $region21: #{tpu_custom_call.1} parent=1 // pred_fallthru
      _
    %v41 = vld [vmem:[#allocation2] sm:$0xff]
    %v42 = vld [vmem:[#allocation5] sm:$0xff]
    %v43 = vld [vmem:[#allocation5 + $0x8] sm:$0xff]
    %v44 = vld [vmem:[#allocation5 + $0x10] sm:$0xff]
    %v45 = vld [vmem:[#allocation5 + $0x18] sm:$0xff]
    %v46 = vld [vmem:[#allocation5 + $0x20] sm:$0xff]
    %v47 = vld [vmem:[#allocation5 + $0x28] sm:$0xff]
    %v48 = vld [vmem:[#allocation5 + $0x30] sm:$0xff]
    %v49 = vld [vmem:[#allocation5 + $0x38] sm:$0xff]
    %v50 = vld [vmem:[#allocation5 + $0x40] sm:$0xff]
    %v51 = vld [vmem:[#allocation5 + $0x48] sm:$0xff]
    %v52 = vld [vmem:[#allocation5 + $0x50] sm:$0xff]
    %v53 = vld [vmem:[#allocation5 + $0x58] sm:$0xff]
    %v54 = vld [vmem:[#allocation5 + $0x60] sm:$0xff]
    %v55 = vld [vmem:[#allocation5 + $0x68] sm:$0xff]
    %v56 = vld [vmem:[#allocation5 + $0x70] sm:$0xff]
    %v57 = vld [vmem:[#allocation5 + $0x78] sm:$0xff]
    %v58 = vld [vmem:[#allocation5 + $0x80] sm:$0xff]
    %v59 = vld [vmem:[#allocation5 + $0x88] sm:$0xff]
    %v60 = vld [vmem:[#allocation5 + $0x90] sm:$0xff]
    %v61 = vld [vmem:[#allocation5 + $0x98] sm:$0xff]
    %v62 = vld [vmem:[#allocation5 + $0xa0] sm:$0xff]
    %v63 = vld [vmem:[#allocation5 + $0xa8] sm:$0xff]
    %v64 = vld [vmem:[#allocation5 + $0xb0] sm:$0xff]
    %v65 = vld [vmem:[#allocation5 + $0xb8] sm:$0xff]
    %v66 = vld [vmem:[#allocation5 + $0xc0] sm:$0xff]
    %v67 = vld [vmem:[#allocation5 + $0xc8] sm:$0xff]
    %v68 = vld [vmem:[#allocation5 + $0xd0] sm:$0xff]
    %v69 = vld [vmem:[#allocation5 + $0xd8] sm:$0xff]
    %v70 = vld [vmem:[#allocation5 + $0xe0] sm:$0xff]
    %v71 = vld [vmem:[#allocation5 + $0xe8] sm:$0xff]
    %v72 = vld [vmem:[#allocation5 + $0xf0] sm:$0xff]
    %v73 = vld [vmem:[#allocation5 + $0xf8] sm:$0xff]
    %v74 = vld [vmem:[#allocation5 + $0x100] sm:$0xff]
    %v75 = vld [vmem:[#allocation5 + $0x108] sm:$0xff]
    %v76 = vld [vmem:[#allocation5 + $0x110] sm:$0xff]
    %v77 = vld [vmem:[#allocation5 + $0x118] sm:$0xff]
    %v78 = vld [vmem:[#allocation5 + $0x120] sm:$0xff]
    %v79 = vld [vmem:[#allocation5 + $0x128] sm:$0xff]
    %v80 = vld [vmem:[#allocation5 + $0x130] sm:$0xff]
    %v81 = vld [vmem:[#allocation5 + $0x138] sm:$0xff]
    %v82 = vld [vmem:[#allocation5 + $0x140] sm:$0xff]
    %v83 = vld [vmem:[#allocation5 + $0x148] sm:$0xff]
    %v84 = vld [vmem:[#allocation5 + $0x150] sm:$0xff]
    %v85 = vld [vmem:[#allocation5 + $0x158] sm:$0xff]
    %v86 = vld [vmem:[#allocation5 + $0x160] sm:$0xff]
    %v87 = vld [vmem:[#allocation5 + $0x168] sm:$0xff]
    %v88 = vld [vmem:[#allocation5 + $0x170] sm:$0xff]
    %v89 = vld [vmem:[#allocation5 + $0x178] sm:$0xff]
    %v90 = vld [vmem:[#allocation5 + $0x180] sm:$0xff]
    %v91 = vld [vmem:[#allocation5 + $0x188] sm:$0xff]
    %v92 = vld [vmem:[%s2] sm:$0x1]
    %v94 = vlaneseq
    %v95 = vshrl.u32 %v94, 7
    %v96 = vsub.s32 0, %v95
    %v97 = vrot.slane %v92, %v96
    %v100 = vcombine.high %v41, %v41
    %v102 = vunpack.c.l.s4 1983009808
    %v103 = vunpack.c.0.s8 %v102
    %v104 = vlaneseq
    %v105 = vshrl.u32 %v104, 7
    %v106 = vsub.s32 %v103, %v105
    %v107 = vrot.slane %v41, %v106
    %v109 = vunpack.c.l.s4 1983009808
    %v110 = vunpack.c.0.s8 %v109
    %v111 = vlaneseq
    %v112 = vshrl.u32 %v111, 7
    %v113 = vsub.s32 %v110, %v112
    %v114 = vrot.slane %v100, %v113
    %v115 = vcombine.high %v107, %v107
    %v116 = vcombine.high %v114, %v114
    %vm120 = vcmask 130048
    %v121 = vsel %vm120, %v116, 0
    %123 = vmatprep.subr.mxu0 0.0
    %124 = vmatpush1.msra.mxu0 %v57
    %125 = vmatprep.subr.mxu0 0.0
    %126 = vmatpush1.msra.mxu0 %v56
    %127 = vmatprep.subr.mxu0 0.0
    %128 = vmatpush1.msra.mxu0 %v55
    %129 = vmatprep.subr.mxu0 0.0
    %130 = vmatpush1.msra.mxu0 %v54
    %131 = vmatprep.subr.mxu0 0.0
    %132 = vmatpush1.msra.mxu0 %v53
    %133 = vmatprep.subr.mxu0 0.0
    %134 = vmatpush1.msra.mxu0 %v52
    %135 = vmatprep.subr.mxu0 0.0
    %136 = vmatpush1.msra.mxu0 %v51
    %137 = vmatprep.subr.mxu0 0.0
    %138 = vmatpush1.msra.mxu0 %v50
    %139 = vmatprep.subr.mxu0 0.0
    %140 = vmatpush1.msra.mxu0 %v49
    %141 = vmatprep.subr.mxu0 0.0
    %142 = vmatpush1.msra.mxu0 %v48
    %143 = vmatprep.subr.mxu0 0.0
    %144 = vmatpush1.msra.mxu0 %v47
    %145 = vmatprep.subr.mxu0 0.0
    %146 = vmatpush1.msra.mxu0 %v46
    %147 = vmatprep.subr.mxu0 0.0
    %148 = vmatpush1.msra.mxu0 %v45
    %149 = vmatprep.subr.mxu0 0.0
    %150 = vmatpush1.msra.mxu0 %v44
    %151 = vmatprep.subr.mxu0 0.0
    %152 = vmatpush1.msra.mxu0 %v43
    %153 = vmatprep.subr.mxu0 0.0
    %154 = vmatpush1.msra.mxu0 %v42
    %155 = vmatprep.subr.mxu0 0.0
    %156 = vmatpush2.msra.mxu0 %v73
    %157 = vmatprep.subr.mxu0 0.0
    %158 = vmatpush2.msra.mxu0 %v72
    %159 = vmatprep.subr.mxu0 0.0
    %160 = vmatpush2.msra.mxu0 %v71
    %161 = vmatprep.subr.mxu0 0.0
    %162 = vmatpush2.msra.mxu0 %v70
    %163 = vmatprep.subr.mxu0 0.0
    %164 = vmatpush2.msra.mxu0 %v69
    %165 = vmatprep.subr.mxu0 0.0
    %166 = vmatpush2.msra.mxu0 %v68
    %167 = vmatprep.subr.mxu0 0.0
    %168 = vmatpush2.msra.mxu0 %v67
    %169 = vmatprep.subr.mxu0 0.0
    %170 = vmatpush2.msra.mxu0 %v66
    %171 = vmatprep.subr.mxu0 0.0
    %172 = vmatpush2.msra.mxu0 %v65
    %173 = vmatprep.subr.mxu0 0.0
    %174 = vmatpush2.msra.mxu0 %v64
    %175 = vmatprep.subr.mxu0 0.0
    %176 = vmatpush2.msra.mxu0 %v63
    %177 = vmatprep.subr.mxu0 0.0
    %178 = vmatpush2.msra.mxu0 %v62
    %179 = vmatprep.subr.mxu0 0.0
    %180 = vmatpush2.msra.mxu0 %v61
    %181 = vmatprep.subr.mxu0 0.0
    %182 = vmatpush2.msra.mxu0 %v60
    %183 = vmatprep.subr.mxu0 0.0
    %184 = vmatpush2.msra.mxu0 %v59
    %185 = vmatprep.subr.mxu0 0.0
    %186 = vmatpush2.msra.mxu0 %v58
    %187 = vmatprep.mubr.f32.mxu0 %v115
    %188 = vmatmul.mubr.f32.gmra.mxu0 %v107
    %v189 = vpop.f32.mrf.mxu0
    %v190 = vadd.f32 %v97, %v189
    %v191 = vpop.f32.mrf.mxu0
    %192 = vdwg.mxu0
    %193 = vmatprep.subr.mxu0 0.0
    %194 = vmatpush1.msra.mxu0 %v89
    %195 = vmatprep.subr.mxu0 0.0
    %196 = vmatpush1.msra.mxu0 %v88
    %197 = vmatprep.subr.mxu0 0.0
    %198 = vmatpush1.msra.mxu0 %v87
    %199 = vmatprep.subr.mxu0 0.0
    %200 = vmatpush1.msra.mxu0 %v86
    %201 = vmatprep.subr.mxu0 0.0
    %202 = vmatpush1.msra.mxu0 %v85
    %203 = vmatprep.subr.mxu0 0.0
    %204 = vmatpush1.msra.mxu0 %v84
    %205 = vmatprep.subr.mxu0 0.0
    %206 = vmatpush1.msra.mxu0 %v83
    %207 = vmatprep.subr.mxu0 0.0
    %208 = vmatpush1.msra.mxu0 %v82
    %209 = vmatprep.subr.mxu0 0.0
    %210 = vmatpush1.msra.mxu0 %v81
    %211 = vmatprep.subr.mxu0 0.0
    %212 = vmatpush1.msra.mxu0 %v80
    %213 = vmatprep.subr.mxu0 0.0
    %214 = vmatpush1.msra.mxu0 %v79
    %215 = vmatprep.subr.mxu0 0.0
    %216 = vmatpush1.msra.mxu0 %v78
    %217 = vmatprep.subr.mxu0 0.0
    %218 = vmatpush1.msra.mxu0 %v77
    %219 = vmatprep.subr.mxu0 0.0
    %220 = vmatpush1.msra.mxu0 %v76
    %221 = vmatprep.subr.mxu0 0.0
    %222 = vmatpush1.msra.mxu0 %v75
    %223 = vmatprep.subr.mxu0 0.0
    %224 = vmatpush1.msra.mxu0 %v74
    %225 = vmatprep.subr.mxu0 0.0
    %226 = vmatpush2.msra.mxu0 0.0
    %227 = vmatprep.subr.mxu0 0.0
    %228 = vmatpush2.msra.mxu0 0.0
    %229 = vmatprep.subr.mxu0 0.0
    %230 = vmatpush2.msra.mxu0 0.0
    %231 = vmatprep.subr.mxu0 0.0
    %232 = vmatpush2.msra.mxu0 0.0
    %233 = vmatprep.subr.mxu0 0.0
    %234 = vmatpush2.msra.mxu0 0.0
    %235 = vmatprep.subr.mxu0 0.0
    %236 = vmatpush2.msra.mxu0 0.0
    %237 = vmatprep.subr.mxu0 0.0
    %238 = vmatpush2.msra.mxu0 0.0
    %239 = vmatprep.subr.mxu0 0.0
    %240 = vmatpush2.msra.mxu0 0.0
    %241 = vmatprep.subr.mxu0 0.0
    %242 = vmatpush2.msra.mxu0 0.0
    %243 = vmatprep.subr.mxu0 0.0
    %244 = vmatpush2.msra.mxu0 0.0
    %245 = vmatprep.subr.mxu0 0.0
    %246 = vmatpush2.msra.mxu0 0.0
    %247 = vmatprep.subr.mxu0 0.0
    %248 = vmatpush2.msra.mxu0 0.0
    %249 = vmatprep.subr.mxu0 0.0
    %250 = vmatpush2.msra.mxu0 0.0
    %251 = vmatprep.subr.mxu0 0.0
    %252 = vmatpush2.msra.mxu0 0.0
    %253 = vmatprep.subr.mxu0 0.0
    %254 = vmatpush2.msra.mxu0 %v91
    %255 = vmatprep.subr.mxu0 0.0
    %256 = vmatpush2.msra.mxu0 %v90
    %257 = vmatprep.mubr.f32.mxu0 %v121
    %258 = vmatmul.mubr.f32.gmra.mxu0 %v114
    %v259 = vpop.f32.mrf.mxu0
    %v260 = vadd.f32 %v190, %v259
    %v261 = vpop.f32.mrf.mxu0
    %262 = vdwg.mxu0
    %263 = vst [vmem:[#allocation7] sm:$0x3] %v260
    // Predicated region
    $region22: #{tpu_custom_call.1} parent=1 // pred_check
      _
    $region23: #{tpu_custom_call.1} parent=1 // pred_check_branch
      %265 = sbr.rel (0) target = $region25
    $region24: #{tpu_custom_call.1} parent=1 // pred_region
      %s267 = ssub.s32 32, 32
      %268 = vsyncadd [#allocation4], %s267
      %s270 = sshll.u32 [#allocation7], 4
      %s271 = int_to_ptr.vmem [resolvable:$true] %s270
      %273 = dma.vmem_to_hbm [thread:$0]  %s271, 32, %s3, [#allocation4]
    $region25: #{tpu_custom_call.1} parent=1 // pred_fallthru
      _
    // Predicated region
    $region26: #{tpu_custom_call.1} parent=1 // pred_check
      _
    $region27: #{tpu_custom_call.1} parent=1 // pred_check_branch
      %275 = sbr.rel (0) target = $region29
    $region28: #{tpu_custom_call.1} parent=1 // pred_region
      %276 = dma.done [#allocation4], 32
    $region29: #{tpu_custom_call.1} parent=1 // pred_fallthru
      _
    %277 = vsyncpa [#allocation3], 1
    %278 = vsyncpa [#allocation6], 1
    %279 = vsyncpa [#allocation4], 1

</llo_original>
